<compile_context>
chip_gen: v7x
topology: tpu7x:2x2x1
jax: 0.10.0
libtpu: 0.0.40
codegen_flags: <defaults>
</compile_context>

<pallas_src>
import functools

import jax
import jax.numpy as jnp
from jax.experimental import pallas as pl
from jax.experimental.pallas import tpu as pltpu


def _round_up(x, m):
    return ((x + m - 1) // m) * m


def _generator_s_kernel(
    x_ref,        # (TILE_B, N)       input ratings tile (any float dtype)
    w_enc_ref,    # (N, H_pad)        fused encoder weight [Wd | Ws | 0]
    b_enc_ref,    # (1, H_pad)        fused encoder bias   [bd | bs | 0] (f32)
    w_dec_ref,    # (H_pad, N)        decoder weight (zero rows on the pad)
    b_dec_ref,    # (1, N)            decoder bias (f32)
    hs_ref,       # (TILE_B, Hs)      hidden_s output
    hd_ref,       # (TILE_B, Hd)      hidden_d output
    pred_ref,     # (TILE_B, N)       decoder output
    *,
    hd_size,
    hs_size,
):
    # Cast the activation tile to the weight dtype (no-op for f32, bf16 MXU
    # fast path otherwise).  Biases / sigmoid stay in f32; accumulation is f32.
    x = x_ref[...].astype(w_enc_ref.dtype)

    # Single fused encoder GEMM + f32 bias + sigmoid.
    z = jnp.dot(x, w_enc_ref[...], preferred_element_type=jnp.float32)
    h = jax.nn.sigmoid(z + b_enc_ref[...])          # (TILE_B, H_pad), f32

    # Single decoder GEMM on the (already concatenated) hidden.
    pred = (
        jnp.dot(h.astype(w_dec_ref.dtype), w_dec_ref[...],
                preferred_element_type=jnp.float32)
        + b_dec_ref[...]
    )

    # Exact-width outputs: no post-kernel column slicing / relayout needed.
    hd_ref[...] = h[:, :hd_size].astype(hd_ref.dtype)
    hs_ref[...] = h[:, hd_size:hd_size + hs_size].astype(hs_ref.dtype)
    pred_ref[...] = pred.astype(pred_ref.dtype)


def init_params(key, num_items_s, hidden_d, hidden_s):
    """Deterministic synthetic parameters in PyTorch nn.Linear layout."""
    k = jax.random.split(key, 6)
    # PyTorch Linear: weight (out_features, in_features), bias (out_features,)
    return {
        "wd": jax.random.normal(k[0], (hidden_d, num_items_s), jnp.float32) * 0.05,
        "bd": jax.random.normal(k[1], (hidden_d,), jnp.float32) * 0.05,
        "ws": jax.random.normal(k[2], (hidden_s, num_items_s), jnp.float32) * 0.05,
        "bs": jax.random.normal(k[3], (hidden_s,), jnp.float32) * 0.05,
        "wdec": jax.random.normal(
            k[4], (num_items_s, hidden_d + hidden_s), jnp.float32) * 0.05,
        "bdec": jax.random.normal(k[5], (num_items_s,), jnp.float32) * 0.05,
    }


def prepare_kernel_params(params, compute_dtype=jnp.float32):
    """Fuse + transpose + zero-pad PyTorch-layout params for the kernel.

    Weights are stored (in_features, out_features) so the kernel does x @ W.
    Encoder output columns are laid out [hidden_d | hidden_s | pad] to match
    torch.concat((hidden_d, hidden_s), dim=1); decoder rows beyond H are zero
    so the sigmoid(0)=0.5 pad lanes contribute nothing to pred.
    Only the hidden dim is padded (to 128 lanes); the feature dim N stays
    exact, so x never needs a column pad.
    """
    wd, bd = params["wd"], params["bd"]            # (Hd, N), (Hd,)
    ws, bs = params["ws"], params["bs"]            # (Hs, N), (Hs,)
    wdec, bdec = params["wdec"], params["bdec"]    # (N, Hd+Hs), (N,)

    Hd, N = wd.shape
    Hs = ws.shape[0]
    H = Hd + Hs
    H_pad = _round_up(H, 128)

    w_enc = jnp.zeros((N, H_pad), jnp.float32)
    w_enc = w_enc.at[:, :Hd].set(wd.T)
    w_enc = w_enc.at[:, Hd:H].set(ws.T)

    b_enc = jnp.zeros((1, H_pad), jnp.float32)
    b_enc = b_enc.at[0, :Hd].set(bd)
    b_enc = b_enc.at[0, Hd:H].set(bs)

    w_dec = jnp.zeros((H_pad, N), jnp.float32)
    w_dec = w_dec.at[:H, :].set(wdec.T)

    b_dec = bdec.reshape(1, N).astype(jnp.float32)

    return {
        "w_enc": w_enc.astype(compute_dtype),   # bf16 on v5e/v6e/v7x halves DMA
        "b_enc": b_enc,                          # biases / sigmoid stay f32
        "w_dec": w_dec.astype(compute_dtype),
        "b_dec": b_dec,
        "Hd": Hd,
        "Hs": Hs,
        "N": N,
    }


def generator_s_forward(data_s, kparams, out_dtype=jnp.float32):
    """data_s: (B, 1, N) float array.  Returns (hidden_s, hidden_d, pred)."""
    x = jnp.squeeze(data_s, axis=1)                 # matches torch .squeeze(1)
    B, N = x.shape

    w_enc, b_enc = kparams["w_enc"], kparams["b_enc"]
    w_dec, b_dec = kparams["w_dec"], kparams["b_dec"]
    Hd, Hs = kparams["Hd"], kparams["Hs"]
    H_pad = w_enc.shape[1]
    compute_dtype = w_enc.dtype

    # --- batch tiling -------------------------------------------------------
    # bf16 packs two rows per sublane -> 16-row alignment; f32 -> 8.
    row_align = 16 if compute_dtype == jnp.bfloat16 else 8
    # >= 2 grid steps whenever the batch allows it (v7x: both TensorCores),
    # capped at 1024 rows per tile (HBM-roofline sweet spot, fits VMEM).
    target_steps = 2
    tile_b = min(max(_round_up(pl.cdiv(B, target_steps), row_align), row_align),
                 1024)
    grid_b = pl.cdiv(B, tile_b)
    b_pad = grid_b * tile_b

    # --- input staging (avoid wrapper copies when possible) -----------------
    if b_pad != B:
        # Fuse the row pad with the compute-dtype cast: one copy, not two.
        x_in = jnp.pad(x.astype(compute_dtype), ((0, b_pad - B), (0, 0)))
    else:
        # No pad needed: pass through untouched (zero wrapper copies); the
        # kernel casts the tile after the DMA if dtypes differ.
        x_in = x

    out_shapes = (
        jax.ShapeDtypeStruct((b_pad, Hs), out_dtype),   # hidden_s
        jax.ShapeDtypeStruct((b_pad, Hd), out_dtype),   # hidden_d
        jax.ShapeDtypeStruct((b_pad, N), out_dtype),    # pred
    )

    batch_block = lambda shape: pl.BlockSpec(shape, lambda i: (i, 0))
    resident = lambda shape: pl.BlockSpec(shape, lambda i: (0, 0))

    itemsize = lambda a: jnp.dtype(a.dtype).itemsize
    out_isz = jnp.dtype(out_dtype).itemsize
    cost = pl.CostEstimate(
        flops=int(4 * b_pad * N * H_pad),                    # two GEMMs
        transcendentals=int(b_pad * H_pad),                  # sigmoid
        bytes_accessed=int(
            x_in.size * itemsize(x_in)
            + w_enc.size * itemsize(w_enc) + w_dec.size * itemsize(w_dec)
            + b_enc.size * 4 + b_dec.size * 4
            + b_pad * (Hd + Hs + N) * out_isz
        ),
    )

    kernel = functools.partial(_generator_s_kernel, hd_size=Hd, hs_size=Hs)

    hs_p, hd_p, pred_p = pl.pallas_call(
        kernel,
        out_shape=out_shapes,
        grid=(grid_b,),
        in_specs=[
            batch_block((tile_b, N)),        # x tile, pipelined over batch
            resident(w_enc.shape),           # weights fetched once, reused
            resident(b_enc.shape),
            resident(w_dec.shape),
            resident(b_dec.shape),
        ],
        out_specs=(
            batch_block((tile_b, Hs)),
            batch_block((tile_b, Hd)),
            batch_block((tile_b, N)),
        ),
        compiler_params=pltpu.CompilerParams(
            dimension_semantics=("parallel",),   # v7x: shard batch over 2 TCs
            vmem_limit_bytes=32 * 1024 * 1024,
        ),
        cost_estimate=cost,
    )(x_in, w_enc, b_enc, w_dec, b_dec)

    if b_pad != B:
        hs_p, hd_p, pred_p = hs_p[:B], hd_p[:B], pred_p[:B]
    return hs_p, hd_p, pred_p


def _reference(data_s, params):
    """Pure-JAX reference using PyTorch-layout parameters (f32)."""
    x = jnp.squeeze(data_s, axis=1)
    hd = jax.nn.sigmoid(x @ params["wd"].T + params["bd"])
    hs = jax.nn.sigmoid(x @ params["ws"].T + params["bs"])
    h = jnp.concatenate([hd, hs], axis=1)
    pred = h @ params["wdec"].T + params["bdec"]
    return hs, hd, pred


if __name__ == "__main__":
    # Small, module-consistent shapes.
    B = 8              # batch
    num_items_s = 256  # config.num_items_s
    hidden_d = 64      # config.hidden_size_gen_s_d
    hidden_s = 32      # config.hidden_size_gen_s_s

    key = jax.random.PRNGKey(0)
    kx, kp = jax.random.split(key)
    data_s = jax.random.uniform(kx, (B, 1, num_items_s), jnp.float32)
    params = init_params(kp, num_items_s, hidden_d, hidden_s)
    hs_ref, hd_ref, pred_ref = _reference(data_s, params)

    # --- f32 path: exact (tight tolerances) ---------------------------------
    kparams_f32 = prepare_kernel_params(params, compute_dtype=jnp.float32)
    hs, hd, pred = generator_s_forward(data_s, kparams_f32)
    jax.block_until_ready((hs, hd, pred))
    assert hs.shape == (B, hidden_s) and hd.shape == (B, hidden_d)
    assert pred.shape == (B, num_items_s)
    assert jnp.allclose(hs, hs_ref, atol=1e-5), "f32 hidden_s mismatch"
    assert jnp.allclose(hd, hd_ref, atol=1e-5), "f32 hidden_d mismatch"
    assert jnp.allclose(pred, pred_ref, atol=1e-4), "f32 pred mismatch"

    # --- bf16 path: halves weight/activation DMA, f32 accumulation ----------
    kparams_bf16 = prepare_kernel_params(params, compute_dtype=jnp.bfloat16)
    hs_b, hd_b, pred_b = generator_s_forward(data_s, kparams_bf16)
    jax.block_until_ready((hs_b, hd_b, pred_b))
    assert jnp.allclose(hs_b, hs_ref, atol=3e-2), "bf16 hidden_s mismatch"
    assert jnp.allclose(hd_b, hd_ref, atol=3e-2), "bf16 hidden_d mismatch"
    assert jnp.allclose(pred_b, pred_ref, atol=3e-2), "bf16 pred mismatch"

    print("KERNEL_OK")
</pallas_src>

<mosaic_0001>
module attributes {stable_mosaic.version = 11 : i64} {
  func.func @_generator_s_kernel(%arg0: i32, %arg1: memref<8x256xf32, #tpu.memory_space<vmem>>, %arg2: memref<256x128xf32, #tpu.memory_space<vmem>>, %arg3: memref<1x128xf32, #tpu.memory_space<vmem>>, %arg4: memref<128x256xf32, #tpu.memory_space<vmem>>, %arg5: memref<1x256xf32, #tpu.memory_space<vmem>>, %arg6: memref<8x32xf32, #tpu.memory_space<vmem>>, %arg7: memref<8x64xf32, #tpu.memory_space<vmem>>, %arg8: memref<8x256xf32, #tpu.memory_space<vmem>>) attributes {dimension_semantics = [#tpu.dimension_semantics<parallel>], iteration_bounds = array<i64: 1>, scalar_prefetch = 0 : i64, scratch_operands = 0 : i64, tpu.core_type = #tpu.core_type<tc>, window_params = [{transform_indices = @transform_0, window_bounds = array<i64: 8, 256>}, {pipeline_mode = #tpu.pipeline_mode<synchronous>, transform_indices = @transform_1, window_bounds = array<i64: 256, 128>}, {pipeline_mode = #tpu.pipeline_mode<synchronous>, transform_indices = @transform_2, window_bounds = array<i64: 1, 128>}, {pipeline_mode = #tpu.pipeline_mode<synchronous>, transform_indices = @transform_3, window_bounds = array<i64: 128, 256>}, {pipeline_mode = #tpu.pipeline_mode<synchronous>, transform_indices = @transform_4, window_bounds = array<i64: 1, 256>}, {transform_indices = @transform_5, window_bounds = array<i64: 8, 32>}, {transform_indices = @transform_6, window_bounds = array<i64: 8, 64>}, {transform_indices = @transform_7, window_bounds = array<i64: 8, 256>}]} {
    %c0 = arith.constant 0 : index
    %c0_0 = arith.constant 0 : index
    %0 = vector.load %arg1[%c0, %c0_0] : memref<8x256xf32, #tpu.memory_space<vmem>>, vector<8x256xf32>
    %c0_1 = arith.constant 0 : index
    %c0_2 = arith.constant 0 : index
    %1 = vector.load %arg2[%c0_1, %c0_2] : memref<256x128xf32, #tpu.memory_space<vmem>>, vector<256x128xf32>
    %cst = arith.constant dense<0.000000e+00> : vector<8x128xf32>
    %2 = tpu.matmul %0, %1, %cst {dimension_numbers = #tpu.dot_dimension_numbers<[1], [0], [0], [1], [0, 0, 1, 1], [], []>} : vector<8x256xf32>, vector<256x128xf32>, vector<8x128xf32> -> vector<8x128xf32>
    %c0_3 = arith.constant 0 : index
    %c0_4 = arith.constant 0 : index
    %3 = vector.load %arg3[%c0_3, %c0_4] : memref<1x128xf32, #tpu.memory_space<vmem>>, vector<1x128xf32>
    %4 = vector.broadcast %3 : vector<1x128xf32> to vector<8x128xf32>
    %5 = arith.addf %2, %4 : vector<8x128xf32>
    %6 = arith.negf %5 : vector<8x128xf32>
    %7 = math.exp %6 : vector<8x128xf32>
    %cst_5 = arith.constant 1.000000e+00 : f32
    %8 = vector.broadcast %cst_5 : f32 to vector<8x128xf32>
    %9 = arith.addf %8, %7 : vector<8x128xf32>
    %10 = arith.divf %8, %9 : vector<8x128xf32>
    %c0_6 = arith.constant 0 : index
    %c0_7 = arith.constant 0 : index
    %11 = vector.load %arg4[%c0_6, %c0_7] : memref<128x256xf32, #tpu.memory_space<vmem>>, vector<128x256xf32>
    %cst_8 = arith.constant dense<0.000000e+00> : vector<8x256xf32>
    %12 = tpu.matmul %10, %11, %cst_8 {dimension_numbers = #tpu.dot_dimension_numbers<[1], [0], [0], [1], [0, 0, 1, 1], [], []>} : vector<8x128xf32>, vector<128x256xf32>, vector<8x256xf32> -> vector<8x256xf32>
    %c0_9 = arith.constant 0 : index
    %c0_10 = arith.constant 0 : index
    %13 = vector.load %arg5[%c0_9, %c0_10] : memref<1x256xf32, #tpu.memory_space<vmem>>, vector<1x256xf32>
    %14 = vector.broadcast %13 : vector<1x256xf32> to vector<8x256xf32>
    %15 = arith.addf %12, %14 : vector<8x256xf32>
    %16 = vector.extract_strided_slice %10 {offsets = [0, 0], sizes = [8, 64], strides = [1, 1]} : vector<8x128xf32> to vector<8x64xf32>
    %c0_11 = arith.constant 0 : index
    %c0_12 = arith.constant 0 : index
    %17 = vector.load %arg7[%c0_11, %c0_12] : memref<8x64xf32, #tpu.memory_space<vmem>>, vector<8x64xf32>
    tpu.vector_store %arg7[%c0_11, %c0_12], %16 {strides = array<i32>} : memref<8x64xf32, #tpu.memory_space<vmem>>, vector<8x64xf32>,
    %18 = vector.extract_strided_slice %10 {offsets = [0, 64], sizes = [8, 32], strides = [1, 1]} : vector<8x128xf32> to vector<8x32xf32>
    %c0_13 = arith.constant 0 : index
    %c0_14 = arith.constant 0 : index
    %19 = vector.load %arg6[%c0_13, %c0_14] : memref<8x32xf32, #tpu.memory_space<vmem>>, vector<8x32xf32>
    tpu.vector_store %arg6[%c0_13, %c0_14], %18 {strides = array<i32>} : memref<8x32xf32, #tpu.memory_space<vmem>>, vector<8x32xf32>,
    %c0_15 = arith.constant 0 : index
    %c0_16 = arith.constant 0 : index
    %20 = vector.load %arg8[%c0_15, %c0_16] : memref<8x256xf32, #tpu.memory_space<vmem>>, vector<8x256xf32>
    tpu.vector_store %arg8[%c0_15, %c0_16], %15 {strides = array<i32>} : memref<8x256xf32, #tpu.memory_space<vmem>>, vector<8x256xf32>,
    return
  }
  func.func @transform_0(%arg0: i32) -> (i32, i32) {
    %c0_i32 = arith.constant 0 : i32
    %c0_i32_0 = arith.constant 0 : i32
    return %arg0, %c0_i32 : i32, i32
  }
  func.func @transform_1(%arg0: i32) -> (i32, i32) {
    %c0_i32 = arith.constant 0 : i32
    %c0_i32_0 = arith.constant 0 : i32
    %c0_i32_1 = arith.constant 0 : i32
    return %c0_i32, %c0_i32_0 : i32, i32
  }
  func.func @transform_2(%arg0: i32) -> (i32, i32) {
    %c0_i32 = arith.constant 0 : i32
    %c0_i32_0 = arith.constant 0 : i32
    %c0_i32_1 = arith.constant 0 : i32
    return %c0_i32, %c0_i32_0 : i32, i32
  }
  func.func @transform_3(%arg0: i32) -> (i32, i32) {
    %c0_i32 = arith.constant 0 : i32
    %c0_i32_0 = arith.constant 0 : i32
    %c0_i32_1 = arith.constant 0 : i32
    return %c0_i32, %c0_i32_0 : i32, i32
  }
  func.func @transform_4(%arg0: i32) -> (i32, i32) {
    %c0_i32 = arith.constant 0 : i32
    %c0_i32_0 = arith.constant 0 : i32
    %c0_i32_1 = arith.constant 0 : i32
    return %c0_i32, %c0_i32_0 : i32, i32
  }
  func.func @transform_5(%arg0: i32) -> (i32, i32) {
    %c0_i32 = arith.constant 0 : i32
    %c0_i32_0 = arith.constant 0 : i32
    return %arg0, %c0_i32 : i32, i32
  }
  func.func @transform_6(%arg0: i32) -> (i32, i32) {
    %c0_i32 = arith.constant 0 : i32
    %c0_i32_0 = arith.constant 0 : i32
    return %arg0, %c0_i32 : i32, i32
  }
  func.func @transform_7(%arg0: i32) -> (i32, i32) {
    %c0_i32 = arith.constant 0 : i32
    %c0_i32_0 = arith.constant 0 : i32
    return %arg0, %c0_i32 : i32, i32
  }
}

</mosaic_0001>

<llo_original>
// kernel: tpu_custom_call.1
$region0: #{tpu_custom_call.1}
  #allocation0 [shape = 'u32[]', space=smem, size = 0x4, offset = 0x4, fixed_abs, tag = 'smem constant byte address 0x4 - core index']
  #allocation1 [shape = 'u32[144,128]{1,0:T(1,128)}', space=vmem, size = 0x12000, scoped, tag = 'internal scratch']
  %s0 = inlined_call_operand.hbm [shape: f32[8,256], index: 0, kind: input, shape index: {}]
  %s1 = inlined_call_operand.hbm [shape: f32[256,128], index: 1, kind: input, shape index: {}]
  %s2 = inlined_call_operand.vmem [shape: f32[1,128], index: 2, kind: input, shape index: {}]
  %s3 = inlined_call_operand.hbm [shape: f32[128,256], index: 3, kind: input, shape index: {}]
  %s4 = inlined_call_operand.vmem [shape: f32[1,256], index: 4, kind: input, shape index: {}]
  %s5 = inlined_call_operand.hbm [shape: f32[8,32], index: 5, kind: output, shape index: {0}]
  %s6 = inlined_call_operand.hbm [shape: f32[8,64], index: 6, kind: output, shape index: {1}]
  %s7 = inlined_call_operand.hbm [shape: f32[8,256], index: 7, kind: output, shape index: {2}]
  %8 = xla_tuple %s5, %s6, %s7
  %s9 = sld [smem:[#allocation0]]
  $region58: #{tpu_custom_call.1} parent=0
    _
  %s11 = ssub.s32 1, %s9
  %s12 = scalar_select 0, %s11, %s9
  $region1: #{tpu_custom_call.1} parent=0
    #allocation2 [shape = 'u8[8192]{0}', space=vmem, size = 0x2000, scoped, tag = 'input window, operand 0, single buffered']
    #allocation3 [shape = 's32[1]{0}', space=sflag, size = 0x4, scoped, tag = 'scoped memory for tpu_custom_call.1']
    #allocation4 [shape = 's32[1]{0}', space=sflag, size = 0x4, scoped, tag = 'scoped memory for tpu_custom_call.1']
    #allocation5 [shape = 'u8[131072]{0}', space=vmem, size = 0x20000, scoped, tag = 'input window, operand 1, single buffered']
    #allocation6 [shape = 's32[1]{0}', space=sflag, size = 0x4, scoped, tag = 'scoped memory for tpu_custom_call.1']
    #allocation7 [shape = 'u8[131072]{0}', space=vmem, size = 0x20000, scoped, tag = 'input window, operand 3, single buffered']
    #allocation8 [shape = 'u8[4096]{0}', space=vmem, size = 0x1000, scoped, tag = 'output window, operand 0, single buffered']
    #allocation9 [shape = 'u8[4096]{0}', space=vmem, size = 0x1000, scoped, tag = 'output window, operand 1, single buffered']
    #allocation10 [shape = 's32[1]{0}', space=sflag, size = 0x4, scoped, tag = 'scoped memory for tpu_custom_call.1']
    #allocation11 [shape = 'u8[8192]{0}', space=vmem, size = 0x2000, scoped, tag = 'output window, operand 2, single buffered']
    %13 = vsyncpa [#allocation3], 0
    %14 = vsyncpa [#allocation6], 0
    %15 = vsyncpa [#allocation4], 0
    %16 = vsyncpa [#allocation10], 0
    // Predicated region
    $region2: #{tpu_custom_call.1} parent=1 // pred_check
      _
    $region3: #{tpu_custom_call.1} parent=1 // pred_check_branch
      %18 = sbr.rel (0) target = $region5
    $region4: #{tpu_custom_call.1} parent=1 // pred_region
      %s20 = ssub.s32 256, 256
      %21 = vsyncadd [#allocation3], %s20
      %s23 = sshll.u32 [#allocation2], 4
      %s24 = int_to_ptr.vmem [resolvable:$true] %s23
      %26 = dma.hbm_to_vmem [thread:$0]  %s0, 256, %s24, [#allocation3]
    $region5: #{tpu_custom_call.1} parent=1 // pred_fallthru
      _
    // Predicated region
    $region6: #{tpu_custom_call.1} parent=1 // pred_check
      _
    $region7: #{tpu_custom_call.1} parent=1 // pred_check_branch
      %28 = sbr.rel (0) target = $region9
    $region8: #{tpu_custom_call.1} parent=1 // pred_region
      %s30 = ssub.s32 4096, 4096
      %31 = vsyncadd [#allocation6], %s30
      %s32 = sshll.u32 [#allocation5], 4
      %s33 = int_to_ptr.vmem [resolvable:$true] %s32
      %38 = dma.hbm_to_vmem [thread:$0]  %s1, 4096, %s33, [#allocation6], 128, 128, 8
    $region9: #{tpu_custom_call.1} parent=1 // pred_fallthru
      _
    // Predicated region
    $region10: #{tpu_custom_call.1} parent=1 // pred_check
      _
    $region11: #{tpu_custom_call.1} parent=1 // pred_check_branch
      %40 = sbr.rel (0) target = $region13
    $region12: #{tpu_custom_call.1} parent=1 // pred_region
      _
    $region13: #{tpu_custom_call.1} parent=1 // pred_fallthru
      _
    // Predicated region
    $region14: #{tpu_custom_call.1} parent=1 // pred_check
      _
    $region15: #{tpu_custom_call.1} parent=1 // pred_check_branch
      %42 = sbr.rel (0) target = $region17
    $region16: #{tpu_custom_call.1} parent=1 // pred_region
      %s44 = ssub.s32 4096, 4096
      %45 = vsyncadd [#allocation6], %s44
      %s46 = sshll.u32 [#allocation7], 4
      %s47 = int_to_ptr.vmem [resolvable:$true] %s46
      %52 = dma.hbm_to_vmem [thread:$0]  %s3, 4096, %s47, [#allocation6], 256, 256, 16
    $region17: #{tpu_custom_call.1} parent=1 // pred_fallthru
      _
    // Predicated region
    $region18: #{tpu_custom_call.1} parent=1 // pred_check
      _
    $region19: #{tpu_custom_call.1} parent=1 // pred_check_branch
      %54 = sbr.rel (0) target = $region21
    $region20: #{tpu_custom_call.1} parent=1 // pred_region
      _
    $region21: #{tpu_custom_call.1} parent=1 // pred_fallthru
      _
    // Predicated region
    $region22: #{tpu_custom_call.1} parent=1 // pred_check
      _
    $region23: #{tpu_custom_call.1} parent=1 // pred_check_branch
      %56 = sbr.rel (0) target = $region25
    $region24: #{tpu_custom_call.1} parent=1 // pred_region
      %57 = dma.done [#allocation3], 256
    $region25: #{tpu_custom_call.1} parent=1 // pred_fallthru
      _
    // Predicated region
    $region26: #{tpu_custom_call.1} parent=1 // pred_check
      _
    $region27: #{tpu_custom_call.1} parent=1 // pred_check_branch
      %59 = sbr.rel (0) target = $region29
    $region28: #{tpu_custom_call.1} parent=1 // pred_region
      %60 = dma.done [#allocation6], 4096
    $region29: #{tpu_custom_call.1} parent=1 // pred_fallthru
      _
    // Predicated region
    $region30: #{tpu_custom_call.1} parent=1 // pred_check
      _
    $region31: #{tpu_custom_call.1} parent=1 // pred_check_branch
      %62 = sbr.rel (0) target = $region33
    $region32: #{tpu_custom_call.1} parent=1 // pred_region
      %63 = dma.done [#allocation6], 4096
    $region33: #{tpu_custom_call.1} parent=1 // pred_fallthru
      _
    %v64 = vld [vmem:[#allocation2] sm:$0xff]
    %v65 = vld [vmem:[#allocation2 + $0x8] sm:$0xff]
    %v66 = vld [vmem:[#allocation5] sm:$0xff]
    %v67 = vld [vmem:[#allocation5 + $0x8] sm:$0xff]
    %v68 = vld [vmem:[#allocation5 + $0x10] sm:$0xff]
    %v69 = vld [vmem:[#allocation5 + $0x18] sm:$0xff]
    %v70 = vld [vmem:[#allocation5 + $0x20] sm:$0xff]
    %v71 = vld [vmem:[#allocation5 + $0x28] sm:$0xff]
    %v72 = vld [vmem:[#allocation5 + $0x30] sm:$0xff]
    %v73 = vld [vmem:[#allocation5 + $0x38] sm:$0xff]
    %v74 = vld [vmem:[#allocation5 + $0x40] sm:$0xff]
    %v75 = vld [vmem:[#allocation5 + $0x48] sm:$0xff]
    %v76 = vld [vmem:[#allocation5 + $0x50] sm:$0xff]
    %v77 = vld [vmem:[#allocation5 + $0x58] sm:$0xff]
    %v78 = vld [vmem:[#allocation5 + $0x60] sm:$0xff]
    %v79 = vld [vmem:[#allocation5 + $0x68] sm:$0xff]
    %v80 = vld [vmem:[#allocation5 + $0x70] sm:$0xff]
    %v81 = vld [vmem:[#allocation5 + $0x78] sm:$0xff]
    %v82 = vld [vmem:[#allocation5 + $0x80] sm:$0xff]
    %v83 = vld [vmem:[#allocation5 + $0x88] sm:$0xff]
    %v84 = vld [vmem:[#allocation5 + $0x90] sm:$0xff]
    %v85 = vld [vmem:[#allocation5 + $0x98] sm:$0xff]
    %v86 = vld [vmem:[#allocation5 + $0xa0] sm:$0xff]
    %v87 = vld [vmem:[#allocation5 + $0xa8] sm:$0xff]
    %v88 = vld [vmem:[#allocation5 + $0xb0] sm:$0xff]
    %v89 = vld [vmem:[#allocation5 + $0xb8] sm:$0xff]
    %v90 = vld [vmem:[#allocation5 + $0xc0] sm:$0xff]
    %v91 = vld [vmem:[#allocation5 + $0xc8] sm:$0xff]
    %v92 = vld [vmem:[#allocation5 + $0xd0] sm:$0xff]
    %v93 = vld [vmem:[#allocation5 + $0xd8] sm:$0xff]
    %v94 = vld [vmem:[#allocation5 + $0xe0] sm:$0xff]
    %v95 = vld [vmem:[#allocation5 + $0xe8] sm:$0xff]
    %v96 = vld [vmem:[#allocation5 + $0xf0] sm:$0xff]
    %v97 = vld [vmem:[#allocation5 + $0xf8] sm:$0xff]
    %v98 = vld [vmem:[%s2] sm:$0x1]
    %v100 = vlaneseq
    %v101 = vshrl.u32 %v100, 7
    %v102 = vsub.s32 0, %v101
    %v103 = vrot.slane %v98, %v102
    %105 = vmatprep.subr.mxu0 0.0
    %106 = vmatpush1.msra.mxu0 %v66
    %107 = vmatprep.subr.mxu0 0.0
    %108 = vmatpush1.msra.mxu0 %v67
    %109 = vmatprep.subr.mxu0 0.0
    %110 = vmatpush1.msra.mxu0 %v68
    %111 = vmatprep.subr.mxu0 0.0
    %112 = vmatpush1.msra.mxu0 %v69
    %113 = vmatprep.subr.mxu0 0.0
    %114 = vmatpush1.msra.mxu0 %v70
    %115 = vmatprep.subr.mxu0 0.0
    %116 = vmatpush1.msra.mxu0 %v71
    %117 = vmatprep.subr.mxu0 0.0
    %118 = vmatpush1.msra.mxu0 %v72
    %119 = vmatprep.subr.mxu0 0.0
    %120 = vmatpush1.msra.mxu0 %v73
    %121 = vmatprep.subr.mxu0 0.0
    %122 = vmatpush1.msra.mxu0 %v74
    %123 = vmatprep.subr.mxu0 0.0
    %124 = vmatpush1.msra.mxu0 %v75
    %125 = vmatprep.subr.mxu0 0.0
    %126 = vmatpush1.msra.mxu0 %v76
    %127 = vmatprep.subr.mxu0 0.0
    %128 = vmatpush1.msra.mxu0 %v77
    %129 = vmatprep.subr.mxu0 0.0
    %130 = vmatpush1.msra.mxu0 %v78
    %131 = vmatprep.subr.mxu0 0.0
    %132 = vmatpush1.msra.mxu0 %v79
    %133 = vmatprep.subr.mxu0 0.0
    %134 = vmatpush1.msra.mxu0 %v80
    %135 = vmatprep.subr.mxu0 0.0
    %136 = vmatpush1.msra.mxu0 %v81
    %137 = vmatprep.subr.mxu0 0.0
    %138 = vmatpush1.msra.mxu0 %v82
    %139 = vmatprep.subr.mxu0 0.0
    %140 = vmatpush1.msra.mxu0 %v83
    %141 = vmatprep.subr.mxu0 0.0
    %142 = vmatpush1.msra.mxu0 %v84
    %143 = vmatprep.subr.mxu0 0.0
    %144 = vmatpush1.msra.mxu0 %v85
    %145 = vmatprep.subr.mxu0 0.0
    %146 = vmatpush1.msra.mxu0 %v86
    %147 = vmatprep.subr.mxu0 0.0
    %148 = vmatpush1.msra.mxu0 %v87
    %149 = vmatprep.subr.mxu0 0.0
    %150 = vmatpush1.msra.mxu0 %v88
    %151 = vmatprep.subr.mxu0 0.0
    %152 = vmatpush1.msra.mxu0 %v89
    %153 = vmatprep.subr.mxu0 0.0
    %154 = vmatpush1.msra.mxu0 %v90
    %155 = vmatprep.subr.mxu0 0.0
    %156 = vmatpush1.msra.mxu0 %v91
    %157 = vmatprep.subr.mxu0 0.0
    %158 = vmatpush1.msra.mxu0 %v92
    %159 = vmatprep.subr.mxu0 0.0
    %160 = vmatpush1.msra.mxu0 %v93
    %161 = vmatprep.subr.mxu0 0.0
    %162 = vmatpush1.msra.mxu0 %v94
    %163 = vmatprep.subr.mxu0 0.0
    %164 = vmatpush1.msra.mxu0 %v95
    %165 = vmatprep.subr.mxu0 0.0
    %166 = vmatpush1.msra.mxu0 %v96
    %167 = vmatprep.subr.mxu0 0.0
    %168 = vmatpush1.msra.mxu0 %v97
    %169 = vmatprep.mubr.f32.mxu0 %v65
    %170 = vmatmul.mubr.f32.gmra.mrb[0].mxu0 %v64
    %v171 = vpop.f32.mrb[0].mxu0
    %v172 = vadd.f32 %v103, %v171
    %v173 = vpop.f32.mrb[0].mxu0
    %174 = vdwg.mxu0
    %v175 = vxor.u32 %v172, 2147483648
    %v176 = vmul.f32 %v175, 1.442695
    %v177 = vpow.pop %v176
    %v178 = vadd.f32 %v177, 1.0
    %v179 = vrcp.pop %v178
    %v180 = vmul.f32 1.0, %v179
    %v181 = vld [vmem:[#allocation7] sm:$0xff]
    %v182 = vld [vmem:[#allocation7 + $0x8] sm:$0xff]
    %v183 = vld [vmem:[#allocation7 + $0x10] sm:$0xff]
    %v184 = vld [vmem:[#allocation7 + $0x18] sm:$0xff]
    %v185 = vld [vmem:[#allocation7 + $0x20] sm:$0xff]
    %v186 = vld [vmem:[#allocation7 + $0x28] sm:$0xff]
    %v187 = vld [vmem:[#allocation7 + $0x30] sm:$0xff]
    %v188 = vld [vmem:[#allocation7 + $0x38] sm:$0xff]
    %v189 = vld [vmem:[#allocation7 + $0x40] sm:$0xff]
    %v190 = vld [vmem:[#allocation7 + $0x48] sm:$0xff]
    %v191 = vld [vmem:[#allocation7 + $0x50] sm:$0xff]
    %v192 = vld [vmem:[#allocation7 + $0x58] sm:$0xff]
    %v193 = vld [vmem:[#allocation7 + $0x60] sm:$0xff]
    %v194 = vld [vmem:[#allocation7 + $0x68] sm:$0xff]
    %v195 = vld [vmem:[#allocation7 + $0x70] sm:$0xff]
    %v196 = vld [vmem:[#allocation7 + $0x78] sm:$0xff]
    %v197 = vld [vmem:[#allocation7 + $0x80] sm:$0xff]
    %v198 = vld [vmem:[#allocation7 + $0x88] sm:$0xff]
    %v199 = vld [vmem:[#allocation7 + $0x90] sm:$0xff]
    %v200 = vld [vmem:[#allocation7 + $0x98] sm:$0xff]
    %v201 = vld [vmem:[#allocation7 + $0xa0] sm:$0xff]
    %v202 = vld [vmem:[#allocation7 + $0xa8] sm:$0xff]
    %v203 = vld [vmem:[#allocation7 + $0xb0] sm:$0xff]
    %v204 = vld [vmem:[#allocation7 + $0xb8] sm:$0xff]
    %v205 = vld [vmem:[#allocation7 + $0xc0] sm:$0xff]
    %v206 = vld [vmem:[#allocation7 + $0xc8] sm:$0xff]
    %v207 = vld [vmem:[#allocation7 + $0xd0] sm:$0xff]
    %v208 = vld [vmem:[#allocation7 + $0xd8] sm:$0xff]
    %v209 = vld [vmem:[#allocation7 + $0xe0] sm:$0xff]
    %v210 = vld [vmem:[#allocation7 + $0xe8] sm:$0xff]
    %v211 = vld [vmem:[#allocation7 + $0xf0] sm:$0xff]
    %v212 = vld [vmem:[#allocation7 + $0xf8] sm:$0xff]
    %v213 = vld [vmem:[%s4] sm:$0x3]
    %v215 = vlaneseq
    %v216 = vshrl.u32 %v215, 7
    %v217 = vsub.s32 0, %v216
    %v218 = vrot.slane %v213, %v217
    %v219 = vlaneseq
    %v220 = vshrl.u32 %v219, 7
    %v221 = vsub.s32 1, %v220
    %v222 = vrot.slane %v213, %v221
    %225 = vmatprep.subr.mxu0 %v182
    %226 = vmatpush1.msra.mxu0 %v181
    %227 = vmatprep.subr.mxu0 %v184
    %228 = vmatpush1.msra.mxu0 %v183
    %229 = vmatprep.subr.mxu0 %v186
    %230 = vmatpush1.msra.mxu0 %v185
    %231 = vmatprep.subr.mxu0 %v188
    %232 = vmatpush1.msra.mxu0 %v187
    %233 = vmatprep.subr.mxu0 %v190
    %234 = vmatpush1.msra.mxu0 %v189
    %235 = vmatprep.subr.mxu0 %v192
    %236 = vmatpush1.msra.mxu0 %v191
    %237 = vmatprep.subr.mxu0 %v194
    %238 = vmatpush1.msra.mxu0 %v193
    %239 = vmatprep.subr.mxu0 %v196
    %240 = vmatpush1.msra.mxu0 %v195
    %241 = vmatprep.subr.mxu0 %v198
    %242 = vmatpush1.msra.mxu0 %v197
    %243 = vmatprep.subr.mxu0 %v200
    %244 = vmatpush1.msra.mxu0 %v199
    %245 = vmatprep.subr.mxu0 %v202
    %246 = vmatpush1.msra.mxu0 %v201
    %247 = vmatprep.subr.mxu0 %v204
    %248 = vmatpush1.msra.mxu0 %v203
    %249 = vmatprep.subr.mxu0 %v206
    %250 = vmatpush1.msra.mxu0 %v205
    %251 = vmatprep.subr.mxu0 %v208
    %252 = vmatpush1.msra.mxu0 %v207
    %253 = vmatprep.subr.mxu0 %v210
    %254 = vmatpush1.msra.mxu0 %v209
    %255 = vmatprep.subr.mxu0 %v212
    %256 = vmatpush1.msra.mxu0 %v211
    %257 = vmatprep.subr.mxu0 0.0
    %258 = vmatpush1.msra.mxu0 0.0
    %259 = vmatprep.subr.mxu0 0.0
    %260 = vmatpush1.msra.mxu0 0.0
    %261 = vmatprep.subr.mxu0 0.0
    %262 = vmatpush1.msra.mxu0 0.0
    %263 = vmatprep.subr.mxu0 0.0
    %264 = vmatpush1.msra.mxu0 0.0
    %265 = vmatprep.subr.mxu0 0.0
    %266 = vmatpush1.msra.mxu0 0.0
    %267 = vmatprep.subr.mxu0 0.0
    %268 = vmatpush1.msra.mxu0 0.0
    %269 = vmatprep.subr.mxu0 0.0
    %270 = vmatpush1.msra.mxu0 0.0
    %271 = vmatprep.subr.mxu0 0.0
    %272 = vmatpush1.msra.mxu0 0.0
    %273 = vmatprep.subr.mxu0 0.0
    %274 = vmatpush1.msra.mxu0 0.0
    %275 = vmatprep.subr.mxu0 0.0
    %276 = vmatpush1.msra.mxu0 0.0
    %277 = vmatprep.subr.mxu0 0.0
    %278 = vmatpush1.msra.mxu0 0.0
    %279 = vmatprep.subr.mxu0 0.0
    %280 = vmatpush1.msra.mxu0 0.0
    %281 = vmatprep.subr.mxu0 0.0
    %282 = vmatpush1.msra.mxu0 0.0
    %283 = vmatprep.subr.mxu0 0.0
    %284 = vmatpush1.msra.mxu0 0.0
    %285 = vmatprep.subr.mxu0 0.0
    %286 = vmatpush1.msra.mxu0 0.0
    %287 = vmatprep.subr.mxu0 0.0
    %288 = vmatpush1.msra.mxu0 0.0
    %289 = vmatprep.mubr.f32.mxu0 0.0
    %290 = vmatmul.mubr.f32.gmra.mrb[0].mxu0 %v180
    %v291 = vpop.f32.mrb[0].mxu0
    %v292 = vadd.f32 %v218, %v291
    %v293 = vpop.f32.mrb[0].mxu0
    %v294 = vadd.f32 %v222, %v293
    %295 = vdwg.mxu0
    %vm296 = vcmask 523264
    %297 = vst.msk [vmem:[#allocation9] sm:$0xff] %vm296, %v180
    %299 = vrot.lane.b32.xlu0 %v180, 64
    %v300 = vpop.permute.xlu0 %299
    %vm302 = vcmask 261120
    %303 = vst.msk [vmem:[#allocation8] sm:$0xff] %vm302, %v300
    %304 = vst [vmem:[#allocation11] sm:$0xff] %v292
    %305 = vst [vmem:[#allocation11 + $0x8] sm:$0xff] %v294
    // Predicated region
    $region34: #{tpu_custom_call.1} parent=1 // pred_check
      _
    $region35: #{tpu_custom_call.1} parent=1 // pred_check_branch
      %307 = sbr.rel (0) target = $region37
    $region36: #{tpu_custom_call.1} parent=1 // pred_region
      %s309 = ssub.s32 128, 128
      %310 = vsyncadd [#allocation4], %s309
      %s312 = sshll.u32 [#allocation8], 4
      %s313 = int_to_ptr.vmem [resolvable:$true] %s312
      %315 = dma.vmem_to_hbm [thread:$0]  %s313, 128, %s5, [#allocation4]
    $region37: #{tpu_custom_call.1} parent=1 // pred_fallthru
      _
    // Predicated region
    $region38: #{tpu_custom_call.1} parent=1 // pred_check
      _
    $region39: #{tpu_custom_call.1} parent=1 // pred_check_branch
      %317 = sbr.rel (0) target = $region41
    $region40: #{tpu_custom_call.1} parent=1 // pred_region
      %s319 = ssub.s32 128, 128
      %320 = vsyncadd [#allocation10], %s319
      %s322 = sshll.u32 [#allocation9], 4
      %s323 = int_to_ptr.vmem [resolvable:$true] %s322
      %325 = dma.vmem_to_hbm [thread:$0]  %s323, 128, %s6, [#allocation10]
    $region41: #{tpu_custom_call.1} parent=1 // pred_fallthru
      _
    // Predicated region
    $region42: #{tpu_custom_call.1} parent=1 // pred_check
      _
    $region43: #{tpu_custom_call.1} parent=1 // pred_check_branch
      %327 = sbr.rel (0) target = $region45
    $region44: #{tpu_custom_call.1} parent=1 // pred_region
      %s329 = ssub.s32 256, 256
      %330 = vsyncadd [#allocation10], %s329
      %s332 = sshll.u32 [#allocation11], 4
      %s333 = int_to_ptr.vmem [resolvable:$true] %s332
      %335 = dma.vmem_to_hbm [thread:$0]  %s333, 256, %s7, [#allocation10]
    $region45: #{tpu_custom_call.1} parent=1 // pred_fallthru
      _
    // Predicated region
    $region46: #{tpu_custom_call.1} parent=1 // pred_check
      _
    $region47: #{tpu_custom_call.1} parent=1 // pred_check_branch
      %337 = sbr.rel (0) target = $region49
    $region48: #{tpu_custom_call.1} parent=1 // pred_region
      %338 = dma.done [#allocation4], 128
    $region49: #{tpu_custom_call.1} parent=1 // pred_fallthru
      _
    // Predicated region
    $region50: #{tpu_custom_call.1} parent=1 // pred_check
      _
    $region51: #{tpu_custom_call.1} parent=1 // pred_check_branch
      %340 = sbr.rel (0) target = $region53
    $region52: #{tpu_custom_call.1} parent=1 // pred_region
      %341 = dma.done [#allocation10], 128
    $region53: #{tpu_custom_call.1} parent=1 // pred_fallthru
      _
    // Predicated region
    $region54: #{tpu_custom_call.1} parent=1 // pred_check
      _
    $region55: #{tpu_custom_call.1} parent=1 // pred_check_branch
      %343 = sbr.rel (0) target = $region57
    $region56: #{tpu_custom_call.1} parent=1 // pred_region
      %344 = dma.done [#allocation10], 256
    $region57: #{tpu_custom_call.1} parent=1 // pred_fallthru
      _
    %345 = vsyncpa [#allocation3], 1
    %346 = vsyncpa [#allocation6], 1
    %347 = vsyncpa [#allocation4], 1
    %348 = vsyncpa [#allocation10], 1

</llo_original>
